<compile_context>
chip_gen: v5e
topology: v5e:2x2
jax: 0.10.0
libtpu: 0.0.40
codegen_flags: <defaults>
</compile_context>

<pallas_src>
import functools

import jax
import jax.numpy as jnp
from jax.experimental import pallas as pl
from jax.experimental.pallas import tpu as pltpu

C1 = 0.01 ** 2
C2 = 0.03 ** 2

_F32_TEMPS = 12        # ~peak live f32 temporaries per element inside the kernel
_MIN_GRID_STEPS = 8    # target grid steps (>= 3-4 per v7x TensorCore) when N allows


def _ssim_kernel(x_ref, y_ref, out_ref, *, H, W):
    """x_ref / y_ref / out_ref: (tn, H*W) -- tn lane-flattened (b, c) planes."""
    HW = H * W
    x = x_ref[...].astype(jnp.float32)
    y = y_ref[...].astype(jnp.float32)
    tn = x.shape[0]

    # Reflection-boundary masks, computed once and reused by all four filters.
    flat = jax.lax.broadcasted_iota(jnp.int32, (tn, HW), 1)
    col = flat % W
    first_col = col == 0
    last_col = col == W - 1
    top_row = flat < W
    bot_row = flat >= HW - W

    def pool_sum(a):
        # 3x3 box *sum* (not mean) with ReflectionPad2d(1) semantics, as a
        # separable 1x3 + 3x1 pass on the lane-flattened layout.  The shifted
        # copies are only wrong at the reflected boundary columns/rows, where
        # jnp.where swaps in the mirrored neighbour.
        prv = jnp.concatenate([a[:, :1], a[:, :HW - 1]], axis=1)   # a[j-1]
        nxt = jnp.concatenate([a[:, 1:], a[:, HW - 1:]], axis=1)   # a[j+1]
        h = a + jnp.where(first_col, nxt, prv) + jnp.where(last_col, prv, nxt)
        up = jnp.concatenate([h[:, :W], h[:, :HW - W]], axis=1)    # h[j-W]
        dn = jnp.concatenate([h[:, W:], h[:, HW - W:]], axis=1)    # h[j+W]
        return h + jnp.where(top_row, dn, up) + jnp.where(bot_row, up, dn)

    # Pool order keeps x and y live only as long as needed.
    sxy = pool_sum(x * y)
    sqq = pool_sum(x * x + y * y)     # merged x^2 + y^2 pooling
    sx = pool_sum(x)
    sy = pool_sum(y)

    # SSIM on raw 3x3 sums: mu = S/9 and the /81 sigma terms fold into the
    # rescaled constants below; the 81^2 factors cancel in n/d.
    c1s = jnp.float32(81.0 * C1)
    c2s = jnp.float32(81.0 * C2)
    p2 = 2.0 * (sx * sy)              # 81 * 2*mu_x*mu_y
    ss = sx * sx + sy * sy            # 81 * (mu_x^2 + mu_y^2)
    n = (p2 + c1s) * (18.0 * sxy - p2 + c2s)
    d = (ss + c1s) * (9.0 * sqq - ss + c2s)
    loss = 0.5 - 0.5 * n * pl.reciprocal(d, approx=False)
    out_ref[...] = jnp.clip(loss, 0.0, 1.0).astype(out_ref.dtype)


def _vmem_limit_bytes():
    cap = 64 * 1024 * 1024            # conservative default (v7x per-TC VMEM)
    try:
        cap = int(pltpu.get_tpu_info().vmem_capacity_bytes)
    except Exception:
        pass
    # ~25% headroom under physical capacity for compiler-internal scratch.
    return max(32 * 1024 * 1024, (cap * 3) // 4)


def _choose_tn(N, HW, in_itemsize, vmem_limit):
    """Planes per grid step, budgeted by the in-kernel f32 footprint."""
    if N <= 8:
        return N                      # block second-minor dim == full array dim
    # f32 temporaries + double-buffered in/out blocks, per plane.
    per_plane = HW * (_F32_TEMPS * 4 + 6 * in_itemsize)
    tn_vmem = max(1, (vmem_limit // 2) // per_plane)
    if N >= 8 * _MIN_GRID_STEPS:
        tn_steps = max(8, N // _MIN_GRID_STEPS)
    else:
        tn_steps = 8
    tn = min(tn_vmem, tn_steps, N)
    if tn >= 8:
        tn = (tn // 8) * 8            # keep the block's sublane dim 8-aligned
    return max(1, tn)


def ssim_loss(x, y):
    """SSIM loss matching the PyTorch SSIMLoss.forward. x, y: (B, C, H, W)."""
    assert x.shape == y.shape
    B, C, H, W = x.shape
    assert H >= 2 and W >= 2, "reflection pad of 1 requires H, W >= 2"

    N = B * C
    HW = H * W
    xr = x.reshape(N, HW)             # free reshape; inputs stay in caller dtype
    yr = y.reshape(N, HW)

    vmem_limit = _vmem_limit_bytes()
    tn = _choose_tn(N, HW, x.dtype.itemsize, vmem_limit)
    grid = (pl.cdiv(N, tn),)

    kernel = functools.partial(_ssim_kernel, H=H, W=W)

    # TODO(synk): very large planes (>= ~1080p f32) still need H-tiling with a
    # 2-row reflected halo to fit v7x's 64 MiB per-TensorCore VMEM.
    out = pl.pallas_call(
        kernel,
        out_shape=jax.ShapeDtypeStruct((N, HW), x.dtype),
        grid_spec=pltpu.PrefetchScalarGridSpec(
            num_scalar_prefetch=0,
            grid=grid,
            in_specs=[
                pl.BlockSpec((tn, HW), lambda i: (i, 0)),
                pl.BlockSpec((tn, HW), lambda i: (i, 0)),
            ],
            out_specs=pl.BlockSpec((tn, HW), lambda i: (i, 0)),
        ),
        compiler_params=pltpu.CompilerParams(
            dimension_semantics=("parallel",),
            vmem_limit_bytes=int(vmem_limit),
        ),
    )(xr, yr)

    return out.reshape(B, C, H, W)


def _reference_ssim_loss(x, y):
    """Pure-JAX reference mirroring the PyTorch module exactly."""
    x = x.astype(jnp.float32)
    y = y.astype(jnp.float32)
    xp = jnp.pad(x, ((0, 0), (0, 0), (1, 1), (1, 1)), mode="reflect")
    yp = jnp.pad(y, ((0, 0), (0, 0), (1, 1), (1, 1)), mode="reflect")

    def avgpool3(a):
        B, C, Hp, Wp = a.shape
        H, W = Hp - 2, Wp - 2
        s = jnp.zeros((B, C, H, W), a.dtype)
        for di in range(3):
            for dj in range(3):
                s = s + a[:, :, di:di + H, dj:dj + W]
        return s / 9.0

    mu_x = avgpool3(xp)
    mu_y = avgpool3(yp)
    sigma_x = avgpool3(xp ** 2) - mu_x ** 2
    sigma_y = avgpool3(yp ** 2) - mu_y ** 2
    sigma_xy = avgpool3(xp * yp) - mu_x * mu_y
    n = (2 * mu_x * mu_y + C1) * (2 * sigma_xy + C2)
    d = (mu_x ** 2 + mu_y ** 2 + C1) * (sigma_x + sigma_y + C2)
    return jnp.clip((1 - n / d) / 2, 0.0, 1.0)


if __name__ == "__main__":
    key = jax.random.PRNGKey(0)
    kx, ky = jax.random.split(key)
    B, C, H, W = 2, 4, 16, 16
    x = jax.random.uniform(kx, (B, C, H, W), dtype=jnp.float32)
    y = jax.random.uniform(ky, (B, C, H, W), dtype=jnp.float32)

    out = jax.block_until_ready(ssim_loss(x, y))
    ref = jax.block_until_ready(_reference_ssim_loss(x, y))

    assert out.shape == (B, C, H, W)
    err = float(jnp.max(jnp.abs(out.astype(jnp.float32) - ref)))
    assert err < 1e-4, f"mismatch vs reference: {err}"
    print("KERNEL_OK")
</pallas_src>

<mosaic_0001>
module attributes {stable_mosaic.version = 11 : i64} {
  func.func @_ssim_kernel(%arg0: i32, %arg1: memref<8x256xf32, #tpu.memory_space<vmem>>, %arg2: memref<8x256xf32, #tpu.memory_space<vmem>>, %arg3: memref<8x256xf32, #tpu.memory_space<vmem>>) attributes {dimension_semantics = [#tpu.dimension_semantics<parallel>], iteration_bounds = array<i64: 1>, scalar_prefetch = 0 : i64, scratch_operands = 0 : i64, tpu.core_type = #tpu.core_type<tc>, window_params = [{transform_indices = @transform_0, window_bounds = array<i64: 8, 256>}, {transform_indices = @transform_1, window_bounds = array<i64: 8, 256>}, {transform_indices = @transform_2, window_bounds = array<i64: 8, 256>}]} {
    %c0 = arith.constant 0 : index
    %c0_0 = arith.constant 0 : index
    %0 = vector.load %arg1[%c0, %c0_0] : memref<8x256xf32, #tpu.memory_space<vmem>>, vector<8x256xf32>
    %c0_1 = arith.constant 0 : index
    %c0_2 = arith.constant 0 : index
    %1 = vector.load %arg2[%c0_1, %c0_2] : memref<8x256xf32, #tpu.memory_space<vmem>>, vector<8x256xf32>
    %2 = tpu.iota {dimensions = array<i32: 1>} : vector<8x256xi32>
    %c16_i32 = arith.constant 16 : i32
    %c0_i32 = arith.constant 0 : i32
    %3 = arith.cmpi eq, %c16_i32, %c0_i32 : i32
    %c1_i32 = arith.constant 1 : i32
    %4 = arith.select %3, %c1_i32, %c16_i32 : i32
    %5 = vector.broadcast %4 : i32 to vector<8x256xi32>
    %6 = arith.remsi %2, %5 : vector<8x256xi32>
    %c0_i32_3 = arith.constant 0 : i32
    %7 = vector.broadcast %c0_i32_3 : i32 to vector<8x256xi32>
    %8 = arith.cmpi ne, %6, %7 : vector<8x256xi32>
    %c0_i32_4 = arith.constant 0 : i32
    %9 = vector.broadcast %c0_i32_4 : i32 to vector<8x256xi32>
    %10 = arith.cmpi slt, %6, %9 : vector<8x256xi32>
    %c0_i32_5 = arith.constant 0 : i32
    %11 = arith.cmpi slt, %4, %c0_i32_5 : i32
    %12 = vector.broadcast %11 : i1 to vector<8x256xi1>
    %13 = vector.broadcast %12 : vector<8x256xi1> to vector<8x256xi1>
    %14 = arith.xori %10, %13 : vector<8x256xi1>
    %15 = arith.andi %14, %8 : vector<8x256xi1>
    %16 = vector.broadcast %4 : i32 to vector<8x256xi32>
    %17 = arith.addi %6, %16 : vector<8x256xi32>
    %18 = arith.select %15, %17, %6 : vector<8x256xi1>, vector<8x256xi32>
    %c0_i32_6 = arith.constant 0 : i32
    %19 = vector.broadcast %c0_i32_6 : i32 to vector<8x256xi32>
    %20 = arith.cmpi eq, %18, %19 : vector<8x256xi32>
    %c15_i32 = arith.constant 15 : i32
    %21 = vector.broadcast %c15_i32 : i32 to vector<8x256xi32>
    %22 = arith.cmpi eq, %18, %21 : vector<8x256xi32>
    %c16_i32_7 = arith.constant 16 : i32
    %23 = vector.broadcast %c16_i32_7 : i32 to vector<8x256xi32>
    %24 = arith.cmpi slt, %2, %23 : vector<8x256xi32>
    %c240_i32 = arith.constant 240 : i32
    %25 = vector.broadcast %c240_i32 : i32 to vector<8x256xi32>
    %26 = arith.cmpi sge, %2, %25 : vector<8x256xi32>
    %27 = arith.mulf %0, %1 : vector<8x256xf32>
    %28 = vector.extract_strided_slice %27 {offsets = [0, 0], sizes = [8, 1], strides = [1, 1]} : vector<8x256xf32> to vector<8x1xf32>
    %29 = vector.extract_strided_slice %27 {offsets = [0, 0], sizes = [8, 255], strides = [1, 1]} : vector<8x256xf32> to vector<8x255xf32>
    %30 = tpu.concatenate %28, %29 in 1 : vector<8x1xf32>, vector<8x255xf32> -> vector<8x256xf32>
    %31 = vector.extract_strided_slice %27 {offsets = [0, 1], sizes = [8, 255], strides = [1, 1]} : vector<8x256xf32> to vector<8x255xf32>
    %32 = vector.extract_strided_slice %27 {offsets = [0, 255], sizes = [8, 1], strides = [1, 1]} : vector<8x256xf32> to vector<8x1xf32>
    %33 = tpu.concatenate %31, %32 in 1 : vector<8x255xf32>, vector<8x1xf32> -> vector<8x256xf32>
    %34 = arith.select %20, %33, %30 : vector<8x256xi1>, vector<8x256xf32>
    %35 = arith.addf %27, %34 : vector<8x256xf32>
    %36 = arith.select %22, %30, %33 : vector<8x256xi1>, vector<8x256xf32>
    %37 = arith.addf %35, %36 : vector<8x256xf32>
    %38 = vector.extract_strided_slice %37 {offsets = [0, 0], sizes = [8, 16], strides = [1, 1]} : vector<8x256xf32> to vector<8x16xf32>
    %39 = vector.extract_strided_slice %37 {offsets = [0, 0], sizes = [8, 240], strides = [1, 1]} : vector<8x256xf32> to vector<8x240xf32>
    %40 = tpu.concatenate %38, %39 in 1 : vector<8x16xf32>, vector<8x240xf32> -> vector<8x256xf32>
    %41 = vector.extract_strided_slice %37 {offsets = [0, 16], sizes = [8, 240], strides = [1, 1]} : vector<8x256xf32> to vector<8x240xf32>
    %42 = vector.extract_strided_slice %37 {offsets = [0, 240], sizes = [8, 16], strides = [1, 1]} : vector<8x256xf32> to vector<8x16xf32>
    %43 = tpu.concatenate %41, %42 in 1 : vector<8x240xf32>, vector<8x16xf32> -> vector<8x256xf32>
    %44 = arith.select %24, %43, %40 : vector<8x256xi1>, vector<8x256xf32>
    %45 = arith.addf %37, %44 : vector<8x256xf32>
    %46 = arith.select %26, %40, %43 : vector<8x256xi1>, vector<8x256xf32>
    %47 = arith.addf %45, %46 : vector<8x256xf32>
    %48 = arith.mulf %0, %0 : vector<8x256xf32>
    %49 = arith.mulf %1, %1 : vector<8x256xf32>
    %50 = arith.addf %48, %49 : vector<8x256xf32>
    %51 = vector.extract_strided_slice %50 {offsets = [0, 0], sizes = [8, 1], strides = [1, 1]} : vector<8x256xf32> to vector<8x1xf32>
    %52 = vector.extract_strided_slice %50 {offsets = [0, 0], sizes = [8, 255], strides = [1, 1]} : vector<8x256xf32> to vector<8x255xf32>
    %53 = tpu.concatenate %51, %52 in 1 : vector<8x1xf32>, vector<8x255xf32> -> vector<8x256xf32>
    %54 = vector.extract_strided_slice %50 {offsets = [0, 1], sizes = [8, 255], strides = [1, 1]} : vector<8x256xf32> to vector<8x255xf32>
    %55 = vector.extract_strided_slice %50 {offsets = [0, 255], sizes = [8, 1], strides = [1, 1]} : vector<8x256xf32> to vector<8x1xf32>
    %56 = tpu.concatenate %54, %55 in 1 : vector<8x255xf32>, vector<8x1xf32> -> vector<8x256xf32>
    %57 = arith.select %20, %56, %53 : vector<8x256xi1>, vector<8x256xf32>
    %58 = arith.addf %50, %57 : vector<8x256xf32>
    %59 = arith.select %22, %53, %56 : vector<8x256xi1>, vector<8x256xf32>
    %60 = arith.addf %58, %59 : vector<8x256xf32>
    %61 = vector.extract_strided_slice %60 {offsets = [0, 0], sizes = [8, 16], strides = [1, 1]} : vector<8x256xf32> to vector<8x16xf32>
    %62 = vector.extract_strided_slice %60 {offsets = [0, 0], sizes = [8, 240], strides = [1, 1]} : vector<8x256xf32> to vector<8x240xf32>
    %63 = tpu.concatenate %61, %62 in 1 : vector<8x16xf32>, vector<8x240xf32> -> vector<8x256xf32>
    %64 = vector.extract_strided_slice %60 {offsets = [0, 16], sizes = [8, 240], strides = [1, 1]} : vector<8x256xf32> to vector<8x240xf32>
    %65 = vector.extract_strided_slice %60 {offsets = [0, 240], sizes = [8, 16], strides = [1, 1]} : vector<8x256xf32> to vector<8x16xf32>
    %66 = tpu.concatenate %64, %65 in 1 : vector<8x240xf32>, vector<8x16xf32> -> vector<8x256xf32>
    %67 = arith.select %24, %66, %63 : vector<8x256xi1>, vector<8x256xf32>
    %68 = arith.addf %60, %67 : vector<8x256xf32>
    %69 = arith.select %26, %63, %66 : vector<8x256xi1>, vector<8x256xf32>
    %70 = arith.addf %68, %69 : vector<8x256xf32>
    %71 = vector.extract_strided_slice %0 {offsets = [0, 0], sizes = [8, 1], strides = [1, 1]} : vector<8x256xf32> to vector<8x1xf32>
    %72 = vector.extract_strided_slice %0 {offsets = [0, 0], sizes = [8, 255], strides = [1, 1]} : vector<8x256xf32> to vector<8x255xf32>
    %73 = tpu.concatenate %71, %72 in 1 : vector<8x1xf32>, vector<8x255xf32> -> vector<8x256xf32>
    %74 = vector.extract_strided_slice %0 {offsets = [0, 1], sizes = [8, 255], strides = [1, 1]} : vector<8x256xf32> to vector<8x255xf32>
    %75 = vector.extract_strided_slice %0 {offsets = [0, 255], sizes = [8, 1], strides = [1, 1]} : vector<8x256xf32> to vector<8x1xf32>
    %76 = tpu.concatenate %74, %75 in 1 : vector<8x255xf32>, vector<8x1xf32> -> vector<8x256xf32>
    %77 = arith.select %20, %76, %73 : vector<8x256xi1>, vector<8x256xf32>
    %78 = arith.addf %0, %77 : vector<8x256xf32>
    %79 = arith.select %22, %73, %76 : vector<8x256xi1>, vector<8x256xf32>
    %80 = arith.addf %78, %79 : vector<8x256xf32>
    %81 = vector.extract_strided_slice %80 {offsets = [0, 0], sizes = [8, 16], strides = [1, 1]} : vector<8x256xf32> to vector<8x16xf32>
    %82 = vector.extract_strided_slice %80 {offsets = [0, 0], sizes = [8, 240], strides = [1, 1]} : vector<8x256xf32> to vector<8x240xf32>
    %83 = tpu.concatenate %81, %82 in 1 : vector<8x16xf32>, vector<8x240xf32> -> vector<8x256xf32>
    %84 = vector.extract_strided_slice %80 {offsets = [0, 16], sizes = [8, 240], strides = [1, 1]} : vector<8x256xf32> to vector<8x240xf32>
    %85 = vector.extract_strided_slice %80 {offsets = [0, 240], sizes = [8, 16], strides = [1, 1]} : vector<8x256xf32> to vector<8x16xf32>
    %86 = tpu.concatenate %84, %85 in 1 : vector<8x240xf32>, vector<8x16xf32> -> vector<8x256xf32>
    %87 = arith.select %24, %86, %83 : vector<8x256xi1>, vector<8x256xf32>
    %88 = arith.addf %80, %87 : vector<8x256xf32>
    %89 = arith.select %26, %83, %86 : vector<8x256xi1>, vector<8x256xf32>
    %90 = arith.addf %88, %89 : vector<8x256xf32>
    %91 = vector.extract_strided_slice %1 {offsets = [0, 0], sizes = [8, 1], strides = [1, 1]} : vector<8x256xf32> to vector<8x1xf32>
    %92 = vector.extract_strided_slice %1 {offsets = [0, 0], sizes = [8, 255], strides = [1, 1]} : vector<8x256xf32> to vector<8x255xf32>
    %93 = tpu.concatenate %91, %92 in 1 : vector<8x1xf32>, vector<8x255xf32> -> vector<8x256xf32>
    %94 = vector.extract_strided_slice %1 {offsets = [0, 1], sizes = [8, 255], strides = [1, 1]} : vector<8x256xf32> to vector<8x255xf32>
    %95 = vector.extract_strided_slice %1 {offsets = [0, 255], sizes = [8, 1], strides = [1, 1]} : vector<8x256xf32> to vector<8x1xf32>
    %96 = tpu.concatenate %94, %95 in 1 : vector<8x255xf32>, vector<8x1xf32> -> vector<8x256xf32>
    %97 = arith.select %20, %96, %93 : vector<8x256xi1>, vector<8x256xf32>
    %98 = arith.addf %1, %97 : vector<8x256xf32>
    %99 = arith.select %22, %93, %96 : vector<8x256xi1>, vector<8x256xf32>
    %100 = arith.addf %98, %99 : vector<8x256xf32>
    %101 = vector.extract_strided_slice %100 {offsets = [0, 0], sizes = [8, 16], strides = [1, 1]} : vector<8x256xf32> to vector<8x16xf32>
    %102 = vector.extract_strided_slice %100 {offsets = [0, 0], sizes = [8, 240], strides = [1, 1]} : vector<8x256xf32> to vector<8x240xf32>
    %103 = tpu.concatenate %101, %102 in 1 : vector<8x16xf32>, vector<8x240xf32> -> vector<8x256xf32>
    %104 = vector.extract_strided_slice %100 {offsets = [0, 16], sizes = [8, 240], strides = [1, 1]} : vector<8x256xf32> to vector<8x240xf32>
    %105 = vector.extract_strided_slice %100 {offsets = [0, 240], sizes = [8, 16], strides = [1, 1]} : vector<8x256xf32> to vector<8x16xf32>
    %106 = tpu.concatenate %104, %105 in 1 : vector<8x240xf32>, vector<8x16xf32> -> vector<8x256xf32>
    %107 = arith.select %24, %106, %103 : vector<8x256xi1>, vector<8x256xf32>
    %108 = arith.addf %100, %107 : vector<8x256xf32>
    %109 = arith.select %26, %103, %106 : vector<8x256xi1>, vector<8x256xf32>
    %110 = arith.addf %108, %109 : vector<8x256xf32>
    %111 = arith.mulf %90, %110 : vector<8x256xf32>
    %cst = arith.constant 2.000000e+00 : f32
    %112 = vector.broadcast %cst : f32 to vector<8x256xf32>
    %113 = arith.mulf %112, %111 : vector<8x256xf32>
    %114 = arith.mulf %90, %90 : vector<8x256xf32>
    %115 = arith.mulf %110, %110 : vector<8x256xf32>
    %116 = arith.addf %114, %115 : vector<8x256xf32>
    %cst_8 = arith.constant 8.100000e-03 : f32
    %117 = vector.broadcast %cst_8 : f32 to vector<8x256xf32>
    %118 = arith.addf %113, %117 : vector<8x256xf32>
    %cst_9 = arith.constant 1.800000e+01 : f32
    %119 = vector.broadcast %cst_9 : f32 to vector<8x256xf32>
    %120 = arith.mulf %119, %47 : vector<8x256xf32>
    %121 = arith.subf %120, %113 : vector<8x256xf32>
    %cst_10 = arith.constant 7.290000e-02 : f32
    %122 = vector.broadcast %cst_10 : f32 to vector<8x256xf32>
    %123 = arith.addf %121, %122 : vector<8x256xf32>
    %124 = arith.mulf %118, %123 : vector<8x256xf32>
    %cst_11 = arith.constant 8.100000e-03 : f32
    %125 = vector.broadcast %cst_11 : f32 to vector<8x256xf32>
    %126 = arith.addf %116, %125 : vector<8x256xf32>
    %cst_12 = arith.constant 9.000000e+00 : f32
    %127 = vector.broadcast %cst_12 : f32 to vector<8x256xf32>
    %128 = arith.mulf %127, %70 : vector<8x256xf32>
    %129 = arith.subf %128, %116 : vector<8x256xf32>
    %cst_13 = arith.constant 7.290000e-02 : f32
    %130 = vector.broadcast %cst_13 : f32 to vector<8x256xf32>
    %131 = arith.addf %129, %130 : vector<8x256xf32>
    %132 = arith.mulf %126, %131 : vector<8x256xf32>
    %cst_14 = arith.constant 5.000000e-01 : f32
    %133 = vector.broadcast %cst_14 : f32 to vector<8x256xf32>
    %134 = arith.mulf %133, %124 : vector<8x256xf32>
    %135 = tpu.reciprocal %132 : vector<8x256xf32> -> vector<8x256xf32>
    %136 = arith.mulf %134, %135 : vector<8x256xf32>
    %cst_15 = arith.constant 5.000000e-01 : f32
    %137 = vector.broadcast %cst_15 : f32 to vector<8x256xf32>
    %138 = arith.subf %137, %136 : vector<8x256xf32>
    %cst_16 = arith.constant 0.000000e+00 : f32
    %cst_17 = arith.constant 1.000000e+00 : f32
    %139 = vector.broadcast %cst_16 : f32 to vector<8x256xf32>
    %140 = arith.maximumf %139, %138 : vector<8x256xf32>
    %141 = vector.broadcast %cst_17 : f32 to vector<8x256xf32>
    %142 = arith.minimumf %141, %140 : vector<8x256xf32>
    %c0_18 = arith.constant 0 : index
    %c0_19 = arith.constant 0 : index
    %143 = vector.load %arg3[%c0_18, %c0_19] : memref<8x256xf32, #tpu.memory_space<vmem>>, vector<8x256xf32>
    tpu.vector_store %arg3[%c0_18, %c0_19], %142 {strides = array<i32>} : memref<8x256xf32, #tpu.memory_space<vmem>>, vector<8x256xf32>,
    return
  }
  func.func @transform_0(%arg0: i32) -> (i32, i32) {
    %c0_i32 = arith.constant 0 : i32
    %c0_i32_0 = arith.constant 0 : i32
    return %arg0, %c0_i32 : i32, i32
  }
  func.func @transform_1(%arg0: i32) -> (i32, i32) {
    %c0_i32 = arith.constant 0 : i32
    %c0_i32_0 = arith.constant 0 : i32
    return %arg0, %c0_i32 : i32, i32
  }
  func.func @transform_2(%arg0: i32) -> (i32, i32) {
    %c0_i32 = arith.constant 0 : i32
    %c0_i32_0 = arith.constant 0 : i32
    return %arg0, %c0_i32 : i32, i32
  }
}

</mosaic_0001>

<llo_original>
// kernel: tpu_custom_call.1
$region0: #{tpu_custom_call.1}
  #allocation0 [shape = 'u32[]', space=smem, size = 0x4, offset = 0x4, fixed_abs, tag = 'smem constant byte address 0x4 - core index']
  #allocation1 [shape = 'u32[72,128]{1,0:T(1,128)}', space=vmem, size = 0x9000, scoped, tag = 'internal scratch']
  %s0 = inlined_call_operand.hbm [shape: f32[8,256], index: 0, kind: input, shape index: {}]
  %s1 = inlined_call_operand.hbm [shape: f32[8,256], index: 1, kind: input, shape index: {}]
  %s2 = inlined_call_operand.hbm [shape: f32[8,256], index: 2, kind: output, shape index: {}]
  %s3 = sld [smem:[#allocation0]]
  $region26: #{tpu_custom_call.1} parent=0
    _
  %s5 = ssub.s32 1, %s3
  %s6 = scalar_select 0, %s5, %s3
  $region1: #{tpu_custom_call.1} parent=0
    #allocation2 [shape = 'u8[8192]{0}', space=vmem, size = 0x2000, scoped, tag = 'input window, operand 0, single buffered']
    #allocation3 [shape = 's32[1]{0}', space=sflag, size = 0x4, scoped, tag = 'scoped memory for tpu_custom_call.1']
    #allocation4 [shape = 's32[1]{0}', space=sflag, size = 0x4, scoped, tag = 'scoped memory for tpu_custom_call.1']
    #allocation5 [shape = 'u8[8192]{0}', space=vmem, size = 0x2000, scoped, tag = 'input window, operand 1, single buffered']
    #allocation6 [shape = 's32[1]{0}', space=sflag, size = 0x4, scoped, tag = 'scoped memory for tpu_custom_call.1']
    #allocation7 [shape = 'u8[8192]{0}', space=vmem, size = 0x2000, scoped, tag = 'output window, operand 0, single buffered']
    %7 = vsyncpa [#allocation3], 0
    %8 = vsyncpa [#allocation6], 0
    %9 = vsyncpa [#allocation4], 0
    // Predicated region
    $region2: #{tpu_custom_call.1} parent=1 // pred_check
      _
    $region3: #{tpu_custom_call.1} parent=1 // pred_check_branch
      %11 = sbr.rel (0) target = $region5
    $region4: #{tpu_custom_call.1} parent=1 // pred_region
      %13 = vsyncadd [#allocation3], 0
      %s15 = sshll.u32 %s0, 4
      %s16 = int_to_ptr.hbm [resolvable:$true] %s15
      %s17 = sshll.u32 [#allocation2], 4
      %s18 = int_to_ptr.vmem [resolvable:$true] %s17
      %20 = dma.hbm_to_vmem [thread:$0]  %s16, 256, %s18, [#allocation3]
    $region5: #{tpu_custom_call.1} parent=1 // pred_fallthru
      _
    // Predicated region
    $region6: #{tpu_custom_call.1} parent=1 // pred_check
      _
    $region7: #{tpu_custom_call.1} parent=1 // pred_check_branch
      %22 = sbr.rel (0) target = $region9
    $region8: #{tpu_custom_call.1} parent=1 // pred_region
      %24 = vsyncadd [#allocation6], 0
      %s26 = sshll.u32 %s1, 4
      %s27 = int_to_ptr.hbm [resolvable:$true] %s26
      %s28 = sshll.u32 [#allocation5], 4
      %s29 = int_to_ptr.vmem [resolvable:$true] %s28
      %31 = dma.hbm_to_vmem [thread:$0]  %s27, 256, %s29, [#allocation6]
    $region9: #{tpu_custom_call.1} parent=1 // pred_fallthru
      _
    // Predicated region
    $region10: #{tpu_custom_call.1} parent=1 // pred_check
      _
    $region11: #{tpu_custom_call.1} parent=1 // pred_check_branch
      %33 = sbr.rel (0) target = $region13
    $region12: #{tpu_custom_call.1} parent=1 // pred_region
      %35 = dma.done [#allocation3], 256
    $region13: #{tpu_custom_call.1} parent=1 // pred_fallthru
      _
    // Predicated region
    $region14: #{tpu_custom_call.1} parent=1 // pred_check
      _
    $region15: #{tpu_custom_call.1} parent=1 // pred_check_branch
      %37 = sbr.rel (0) target = $region17
    $region16: #{tpu_custom_call.1} parent=1 // pred_region
      %39 = dma.done [#allocation6], 256
    $region17: #{tpu_custom_call.1} parent=1 // pred_fallthru
      _
    %v40 = vld [vmem:[#allocation2] sm:$0xff]
    %v41 = vld [vmem:[#allocation2 + $0x8] sm:$0xff]
    %v42 = vld [vmem:[#allocation5] sm:$0xff]
    %v43 = vld [vmem:[#allocation5 + $0x8] sm:$0xff]
    %v44 = vlaneseq
    %v45 = vand.u32 %v44, 127
    %v46 = vadd.s32 %v45, 128
    %vm47 = vcmp.lt.s32.totalorder %v45, 0
    %v48 = vsub.s32 0, %v45
    %v49 = vsel %vm47, %v48, %v45
    %v50 = vshrl.u32 %v49, 4
    %v51 = vand.u32 %v49, 15
    %v52 = vsub.s32 0, %v51
    %v53 = vsel %vm47, %v52, %v51
    %vm54 = vcmp.lt.s32.totalorder %v46, 0
    %v55 = vsub.s32 0, %v46
    %v56 = vsel %vm54, %v55, %v46
    %v57 = vshrl.u32 %v56, 4
    %v58 = vand.u32 %v56, 15
    %v59 = vsub.s32 0, %v58
    %v60 = vsel %vm54, %v59, %v58
    %vm61 = vcmp.ne.s32.totalorder %v53, 0
    %vm62 = vcmp.ne.s32.totalorder %v60, 0
    %vm63 = vcmp.lt.s32.totalorder %v53, 0
    %vm64 = vcmp.lt.s32.totalorder %v60, 0
    %vm65 = vmand %vm63, %vm61
    %vm66 = vmand %vm64, %vm62
    %v67 = vadd.s32 %v53, 16
    %v68 = vadd.s32 %v60, 16
    %v69 = vsel %vm65, %v67, %v53
    %v70 = vsel %vm66, %v68, %v60
    %vm71 = vcmp.eq.s32.totalorder %v69, 0
    %vm72 = vcmp.eq.s32.totalorder %v70, 0
    %vm73 = vcmp.eq.s32.totalorder %v69, 15
    %vm74 = vcmp.eq.s32.totalorder %v70, 15
    %vm75 = vcmp.lt.s32.totalorder %v45, 16
    %vm76 = vcmp.lt.s32.totalorder %v46, 16
    %vm77 = vcmp.ge.s32.totalorder %v45, 240
    %vm78 = vcmp.ge.s32.totalorder %v46, 240
    %v79 = vmul.f32 %v40, %v42
    %v80 = vmul.f32 %v41, %v43
    %83 = vrot.lane.b32.xlu0 %v79, 1
    %v84 = vpop.permute.xlu0 %83
    %85 = vrot.lane.b32.xlu0 %v80, 1
    %v86 = vpop.permute.xlu0 %85
    %vm87 = vcmask 7168
    %v88 = vsel %vm87, %v84, %v86
    %v91 = vsel %vm87, %v79, %v84
    %92 = vrot.lane.b32.xlu0 %v79, 127
    %v93 = vpop.permute.xlu0 %92
    %94 = vrot.lane.b32.xlu0 %v80, 127
    %v95 = vpop.permute.xlu0 %94
    %vm96 = vcmask 1039360
    %v97 = vsel %vm96, %v93, %v95
    %v100 = vsel %vm96, %v95, %v80
    %v101 = vsel %vm71, %v97, %v91
    %v102 = vsel %vm72, %v100, %v88
    %v103 = vadd.f32 %v79, %v101
    %v104 = vadd.f32 %v80, %v102
    %v105 = vsel %vm73, %v91, %v97
    %v106 = vsel %vm74, %v88, %v100
    %v107 = vadd.f32 %v103, %v105
    %v108 = vadd.f32 %v104, %v106
    %111 = vrot.lane.b32.xlu0 %v107, 16
    %v112 = vpop.permute.xlu0 %111
    %113 = vrot.lane.b32.xlu0 %v108, 16
    %v114 = vpop.permute.xlu0 %113
    %vm115 = vcmask 130048
    %v116 = vsel %vm115, %v112, %v114
    %v119 = vsel %vm115, %v107, %v112
    %120 = vrot.lane.b32.xlu0 %v107, 112
    %v121 = vpop.permute.xlu0 %120
    %122 = vrot.lane.b32.xlu0 %v108, 112
    %v123 = vpop.permute.xlu0 %122
    %vm124 = vcmask 916480
    %v125 = vsel %vm124, %v121, %v123
    %v128 = vsel %vm124, %v123, %v108
    %v129 = vsel %vm75, %v125, %v119
    %v130 = vsel %vm76, %v128, %v116
    %v131 = vadd.f32 %v107, %v129
    %v132 = vadd.f32 %v108, %v130
    %v133 = vsel %vm77, %v119, %v125
    %v134 = vsel %vm78, %v116, %v128
    %v135 = vadd.f32 %v131, %v133
    %v136 = vadd.f32 %v132, %v134
    %v137 = vmul.f32 %v40, %v40
    %v138 = vmul.f32 %v41, %v41
    %v139 = vmul.f32 %v42, %v42
    %v140 = vmul.f32 %v43, %v43
    %v141 = vadd.f32 %v137, %v139
    %v142 = vadd.f32 %v138, %v140
    %145 = vrot.lane.b32.xlu0 %v141, 1
    %v146 = vpop.permute.xlu0 %145
    %147 = vrot.lane.b32.xlu0 %v142, 1
    %v148 = vpop.permute.xlu0 %147
    %v149 = vsel %vm87, %v146, %v148
    %v152 = vsel %vm87, %v141, %v146
    %153 = vrot.lane.b32.xlu0 %v141, 127
    %v154 = vpop.permute.xlu0 %153
    %155 = vrot.lane.b32.xlu0 %v142, 127
    %v156 = vpop.permute.xlu0 %155
    %v157 = vsel %vm96, %v154, %v156
    %v160 = vsel %vm96, %v156, %v142
    %v161 = vsel %vm71, %v157, %v152
    %v162 = vsel %vm72, %v160, %v149
    %v163 = vadd.f32 %v141, %v161
    %v164 = vadd.f32 %v142, %v162
    %v165 = vsel %vm73, %v152, %v157
    %v166 = vsel %vm74, %v149, %v160
    %v167 = vadd.f32 %v163, %v165
    %v168 = vadd.f32 %v164, %v166
    %171 = vrot.lane.b32.xlu0 %v167, 16
    %v172 = vpop.permute.xlu0 %171
    %173 = vrot.lane.b32.xlu0 %v168, 16
    %v174 = vpop.permute.xlu0 %173
    %v175 = vsel %vm115, %v172, %v174
    %v178 = vsel %vm115, %v167, %v172
    %179 = vrot.lane.b32.xlu0 %v167, 112
    %v180 = vpop.permute.xlu0 %179
    %181 = vrot.lane.b32.xlu0 %v168, 112
    %v182 = vpop.permute.xlu0 %181
    %v183 = vsel %vm124, %v180, %v182
    %v186 = vsel %vm124, %v182, %v168
    %v187 = vsel %vm75, %v183, %v178
    %v188 = vsel %vm76, %v186, %v175
    %v189 = vadd.f32 %v167, %v187
    %v190 = vadd.f32 %v168, %v188
    %v191 = vsel %vm77, %v178, %v183
    %v192 = vsel %vm78, %v175, %v186
    %v193 = vadd.f32 %v189, %v191
    %v194 = vadd.f32 %v190, %v192
    %197 = vrot.lane.b32.xlu0 %v40, 1
    %v198 = vpop.permute.xlu0 %197
    %199 = vrot.lane.b32.xlu0 %v41, 1
    %v200 = vpop.permute.xlu0 %199
    %v201 = vsel %vm87, %v198, %v200
    %v204 = vsel %vm87, %v40, %v198
    %205 = vrot.lane.b32.xlu0 %v40, 127
    %v206 = vpop.permute.xlu0 %205
    %207 = vrot.lane.b32.xlu0 %v41, 127
    %v208 = vpop.permute.xlu0 %207
    %v209 = vsel %vm96, %v206, %v208
    %v212 = vsel %vm96, %v208, %v41
    %v213 = vsel %vm71, %v209, %v204
    %v214 = vsel %vm72, %v212, %v201
    %v215 = vadd.f32 %v40, %v213
    %v216 = vadd.f32 %v41, %v214
    %v217 = vsel %vm73, %v204, %v209
    %v218 = vsel %vm74, %v201, %v212
    %v219 = vadd.f32 %v215, %v217
    %v220 = vadd.f32 %v216, %v218
    %223 = vrot.lane.b32.xlu0 %v219, 16
    %v224 = vpop.permute.xlu0 %223
    %225 = vrot.lane.b32.xlu0 %v220, 16
    %v226 = vpop.permute.xlu0 %225
    %v227 = vsel %vm115, %v224, %v226
    %v230 = vsel %vm115, %v219, %v224
    %231 = vrot.lane.b32.xlu0 %v219, 112
    %v232 = vpop.permute.xlu0 %231
    %233 = vrot.lane.b32.xlu0 %v220, 112
    %v234 = vpop.permute.xlu0 %233
    %v235 = vsel %vm124, %v232, %v234
    %v238 = vsel %vm124, %v234, %v220
    %v239 = vsel %vm75, %v235, %v230
    %v240 = vsel %vm76, %v238, %v227
    %v241 = vadd.f32 %v219, %v239
    %v242 = vadd.f32 %v220, %v240
    %v243 = vsel %vm77, %v230, %v235
    %v244 = vsel %vm78, %v227, %v238
    %v245 = vadd.f32 %v241, %v243
    %v246 = vadd.f32 %v242, %v244
    %249 = vrot.lane.b32.xlu0 %v42, 1
    %v250 = vpop.permute.xlu0 %249
    %251 = vrot.lane.b32.xlu0 %v43, 1
    %v252 = vpop.permute.xlu0 %251
    %v253 = vsel %vm87, %v250, %v252
    %v256 = vsel %vm87, %v42, %v250
    %257 = vrot.lane.b32.xlu0 %v42, 127
    %v258 = vpop.permute.xlu0 %257
    %259 = vrot.lane.b32.xlu0 %v43, 127
    %v260 = vpop.permute.xlu0 %259
    %v261 = vsel %vm96, %v258, %v260
    %v264 = vsel %vm96, %v260, %v43
    %v265 = vsel %vm71, %v261, %v256
    %v266 = vsel %vm72, %v264, %v253
    %v267 = vadd.f32 %v42, %v265
    %v268 = vadd.f32 %v43, %v266
    %v269 = vsel %vm73, %v256, %v261
    %v270 = vsel %vm74, %v253, %v264
    %v271 = vadd.f32 %v267, %v269
    %v272 = vadd.f32 %v268, %v270
    %275 = vrot.lane.b32.xlu0 %v271, 16
    %v276 = vpop.permute.xlu0 %275
    %277 = vrot.lane.b32.xlu0 %v272, 16
    %v278 = vpop.permute.xlu0 %277
    %v279 = vsel %vm115, %v276, %v278
    %v282 = vsel %vm115, %v271, %v276
    %283 = vrot.lane.b32.xlu0 %v271, 112
    %v284 = vpop.permute.xlu0 %283
    %285 = vrot.lane.b32.xlu0 %v272, 112
    %v286 = vpop.permute.xlu0 %285
    %v287 = vsel %vm124, %v284, %v286
    %v290 = vsel %vm124, %v286, %v272
    %v291 = vsel %vm75, %v287, %v282
    %v292 = vsel %vm76, %v290, %v279
    %v293 = vadd.f32 %v271, %v291
    %v294 = vadd.f32 %v272, %v292
    %v295 = vsel %vm77, %v282, %v287
    %v296 = vsel %vm78, %v279, %v290
    %v297 = vadd.f32 %v293, %v295
    %v298 = vadd.f32 %v294, %v296
    %v299 = vmul.f32 %v245, %v297
    %v300 = vmul.f32 %v246, %v298
    %v301 = vmul.f32 %v299, 2.0
    %v302 = vmul.f32 %v300, 2.0
    %v303 = vmul.f32 %v245, %v245
    %v304 = vmul.f32 %v246, %v246
    %v305 = vmul.f32 %v297, %v297
    %v306 = vmul.f32 %v298, %v298
    %v307 = vadd.f32 %v303, %v305
    %v308 = vadd.f32 %v304, %v306
    %v309 = vadd.f32 %v301, 0.0081
    %v310 = vadd.f32 %v302, 0.0081
    %v311 = vmul.f32 %v135, 18.0
    %v312 = vmul.f32 %v136, 18.0
    %v313 = vsub.f32 %v311, %v301
    %v314 = vsub.f32 %v312, %v302
    %v315 = vadd.f32 %v313, 0.0729
    %v316 = vadd.f32 %v314, 0.0729
    %v317 = vmul.f32 %v309, %v315
    %v318 = vmul.f32 %v310, %v316
    %v319 = vadd.f32 %v307, 0.0081
    %v320 = vadd.f32 %v308, 0.0081
    %v321 = vmul.f32 %v193, 9.0
    %v322 = vmul.f32 %v194, 9.0
    %v323 = vsub.f32 %v321, %v307
    %v324 = vsub.f32 %v322, %v308
    %v325 = vadd.f32 %v323, 0.0729
    %v326 = vadd.f32 %v324, 0.0729
    %v327 = vmul.f32 %v319, %v325
    %v328 = vmul.f32 %v320, %v326
    %v329 = vmul.f32 %v317, 0.5
    %v330 = vmul.f32 %v318, 0.5
    %v331 = vrcp.pop %v327
    %v332 = vmul.f32 %v327, %v331
    %v333 = vsub.f32 1.0, %v332
    %v334 = vmul.f32 %v331, %v333
    %v335 = vadd.f32 %v331, %v334
    %vm336 = vweird.f32 %v327
    %vm337 = vweird.f32 %v331
    %vm338 = vmor %vm336, %vm337
    %v339 = vsel %vm338, %v331, %v335
    %v340 = vand.u32 2147483647, %v327
    %vm341 = vcmp.eq.f32.partialorder %v340, 8.507059e+37
    %v342 = vand.u32 %v327, 2147483648
    %v343 = vor.u32 1.1754944e-38, %v342
    %v344 = vsel %vm341, %v343, %v339
    %v345 = vrcp.pop %v328
    %v346 = vmul.f32 %v328, %v345
    %v347 = vsub.f32 1.0, %v346
    %v348 = vmul.f32 %v345, %v347
    %v349 = vadd.f32 %v345, %v348
    %vm350 = vweird.f32 %v328
    %vm351 = vweird.f32 %v345
    %vm352 = vmor %vm350, %vm351
    %v353 = vsel %vm352, %v345, %v349
    %v354 = vand.u32 2147483647, %v328
    %vm355 = vcmp.eq.f32.partialorder %v354, 8.507059e+37
    %v356 = vand.u32 %v328, 2147483648
    %v357 = vor.u32 1.1754944e-38, %v356
    %v358 = vsel %vm355, %v357, %v353
    %v359 = vmul.f32 %v329, %v344
    %v360 = vmul.f32 %v330, %v358
    %v361 = vsub.f32 0.5, %v359
    %v362 = vsub.f32 0.5, %v360
    %v363 = vmax.f32 %v361, 0.0
    %v364 = vmax.f32 %v362, 0.0
    %v365 = vmin.f32 %v363, 1.0
    %v366 = vmin.f32 %v364, 1.0
    %367 = vst [vmem:[#allocation7] sm:$0xff] %v365
    %368 = vst [vmem:[#allocation7 + $0x8] sm:$0xff] %v366
    // Predicated region
    $region18: #{tpu_custom_call.1} parent=1 // pred_check
      _
    $region19: #{tpu_custom_call.1} parent=1 // pred_check_branch
      %370 = sbr.rel (0) target = $region21
    $region20: #{tpu_custom_call.1} parent=1 // pred_region
      %372 = vsyncadd [#allocation4], 0
      %s374 = sshll.u32 [#allocation7], 4
      %s375 = int_to_ptr.vmem [resolvable:$true] %s374
      %s376 = sshll.u32 %s2, 4
      %s377 = int_to_ptr.hbm [resolvable:$true] %s376
      %379 = dma.vmem_to_hbm [thread:$0]  %s375, 256, %s377, [#allocation4]
    $region21: #{tpu_custom_call.1} parent=1 // pred_fallthru
      _
    // Predicated region
    $region22: #{tpu_custom_call.1} parent=1 // pred_check
      _
    $region23: #{tpu_custom_call.1} parent=1 // pred_check_branch
      %381 = sbr.rel (0) target = $region25
    $region24: #{tpu_custom_call.1} parent=1 // pred_region
      %383 = dma.done [#allocation4], 256
    $region25: #{tpu_custom_call.1} parent=1 // pred_fallthru
      _
    %384 = vsyncpa [#allocation3], 1
    %385 = vsyncpa [#allocation6], 1
    %386 = vsyncpa [#allocation4], 1

</llo_original>
